<compile_context>
chip_gen: v6e
topology: v6e:2x2x1
jax: 0.10.0
libtpu: 0.0.40
codegen_flags: <defaults>
</compile_context>

<pallas_src>
import functools

import jax
import jax.numpy as jnp
from jax.experimental import pallas as pl
from jax.experimental.pallas import tpu as pltpu


def _round_up(x, m):
    return (x + m - 1) // m * m


@functools.lru_cache(maxsize=1)
def _chip_info():
    """Returns (num_tensorcores_per_chip, vmem_capacity_bytes), with fallbacks."""
    kind = ""
    try:
        kind = jax.devices()[0].device_kind.lower()
    except Exception:
        pass
    is_v7 = "v7" in kind
    vmem = None
    try:
        info_fn = getattr(pltpu, "get_tpu_info", None)
        if info_fn is not None:
            vmem = int(info_fn().vmem_capacity_bytes)
    except Exception:
        vmem = None
    if vmem is None:
        vmem = (64 if is_v7 else 128) * 1024 * 1024
    num_tc = 2 if is_v7 else 1
    return num_tc, vmem


def _linear_kernel(x_ref, w_ref, b_ref, o_ref):
    # x_ref: (tm, D)   w_ref: (D, tn)   b_ref: (1, tn)   o_ref: (tm, tn)
    # MXU-native layout: contract the last dim of x with the first dim of w,
    # accumulate in f32, add bias, cast to the output dtype.
    acc = jnp.dot(x_ref[...], w_ref[...], preferred_element_type=jnp.float32)
    o_ref[...] = (acc + b_ref[...]).astype(o_ref.dtype)


@functools.partial(
    jax.jit,
    static_argnames=("zero_features", "tm", "tn", "vmem_limit_bytes"))
def one_word_linear_label_probe(batch, weight, bias, *, zero_features=False,
                                tm=None, tn=None, vmem_limit_bytes=None):
    """batch: (B, S, D); weight: (L, D) [native PyTorch layout]; bias: (L,)."""
    B, S, D = batch.shape
    L = weight.shape[0]
    M = B * S

    if zero_features:
        # Zeroed inputs => output is just the broadcast bias; skip the kernel.
        return jnp.broadcast_to(bias.astype(batch.dtype), (B, S, L))

    num_tc, vmem_capacity = _chip_info()
    if vmem_limit_bytes is None:
        # ~102 MiB on v5e/v6e (128 MiB physical), ~51 MiB on v7x (64 MiB
        # physical) -- leaves compiler headroom for internal scratch.
        vmem_limit_bytes = int(0.8 * vmem_capacity)

    itemsize = jnp.dtype(batch.dtype).itemsize
    sub = 8 * (4 // max(1, itemsize))   # sublane multiple: 8 f32, 16 bf16

    # --- label (lane) axis ---------------------------------------------------
    # Lane-dense small-L path: pad L to 128 lanes (unmasked vst, full HBM
    # lines) only when the extra write/slice traffic is small vs the D-wide
    # activation read.
    L_pad128 = _round_up(L, 128)
    lane_pad = (L % 128 != 0) and (L_pad128 <= D)
    L_eff = L_pad128 if lane_pad else L

    if tn is None:
        # Cap the resident label tile; Pallas handles a ragged last block, so
        # no divisibility gate is needed.  tn is either the full (small) L or
        # a lane-dense multiple of 128.
        tn = L_eff if L_eff <= 512 else 512

    # --- row (sublane) axis --------------------------------------------------
    max_rows = _round_up(M, sub)
    if tm is None:
        tm = min(2048, max_rows)            # amortize ~0.35us per-step overhead
    tm = max(sub, _round_up(min(tm, max_rows), sub))

    # VMEM working set: double-buffered x / w / out tiles, bias once, plus the
    # f32 accumulator staging when the output dtype is narrower than f32.
    budget = int(0.7 * vmem_limit_bytes)

    def _working_set(tm_):
        ws = 2 * itemsize * (tm_ * D + D * tn + tm_ * tn) + itemsize * tn
        if itemsize < 4:
            ws += 4 * tm_ * tn              # staged f32 (tm, tn) intermediate
        return ws

    while tm > sub and _working_set(tm) > budget:
        tm = max(sub, (tm // 2 // sub) * sub)

    # Keep >= 2 grid steps per TensorCore (DMA/compute overlap + megacore
    # sharding on v7x) when there is enough work to justify the split.
    min_steps = 2 * num_tc
    if pl.cdiv(M, tm) < min_steps and M >= min_steps * 128:
        tm = _round_up(pl.cdiv(M, min_steps), sub)

    grid_m = pl.cdiv(M, tm)
    grid_l = pl.cdiv(L_eff, tn)

    # --- residency order -----------------------------------------------------
    # rows-outer: weight re-streamed (grid_m-1) times; labels-outer:
    # activations re-streamed (grid_l-1) times.  Keep the cheaper one.
    weight_redundant = (grid_m - 1) * L_eff * D
    act_redundant = (grid_l - 1) * M * D
    l_outer = (grid_l > 1) and ((act_redundant < weight_redundant) or grid_m == 1)

    # --- operands ------------------------------------------------------------
    x2d = batch.reshape(M, D)
    w_t = weight.T                           # one-time (L,D)->(D,L) transpose
    b2d = bias.reshape(1, L)
    if lane_pad:
        w_t = jnp.pad(w_t, ((0, 0), (0, L_eff - L)))
        b2d = jnp.pad(b2d, ((0, 0), (0, L_eff - L)))

    if l_outer:
        grid = (grid_l, grid_m)
        x_map = lambda j, i: (i, 0)
        w_map = lambda j, i: (0, j)
        b_map = lambda j, i: (0, j)
        o_map = lambda j, i: (i, j)
    else:
        grid = (grid_m, grid_l)
        x_map = lambda i, j: (i, 0)
        w_map = lambda i, j: (0, j)
        b_map = lambda i, j: (0, j)
        o_map = lambda i, j: (i, j)

    cost = pl.CostEstimate(
        flops=2 * M * D * L_eff,
        transcendentals=0,
        bytes_accessed=itemsize * (M * D + D * L_eff + M * L_eff + L_eff))

    out2d = pl.pallas_call(
        _linear_kernel,
        out_shape=jax.ShapeDtypeStruct((M, L_eff), batch.dtype),
        grid_spec=pltpu.PrefetchScalarGridSpec(
            num_scalar_prefetch=0,
            grid=grid,
            in_specs=[
                pl.BlockSpec((tm, D), x_map),    # streamed activations
                pl.BlockSpec((D, tn), w_map),    # weight, MXU-native (D, L)
                pl.BlockSpec((1, tn), b_map),    # bias
            ],
            out_specs=pl.BlockSpec((tm, tn), o_map),
        ),
        compiler_params=pltpu.CompilerParams(
            # Outer axis is the one whose operand is visited exactly once ->
            # megacore sharding keeps the dominant HBM reads disjoint.
            dimension_semantics=("parallel", "arbitrary"),
            vmem_limit_bytes=vmem_limit_bytes),
        cost_estimate=cost,
    )(x2d, w_t, b2d)

    if lane_pad:
        out2d = out2d[:, :L]
    return out2d.reshape(B, S, L)


if __name__ == "__main__":
    key = jax.random.PRNGKey(0)
    kx, kw, kb, kx2, kw2, kb2 = jax.random.split(key, 6)

    # --- small shapes consistent with the module's forward ------------------
    batch_size, max_seq_len, model_dim, label_space_size = 2, 8, 32, 8

    x = jax.random.normal(kx, (batch_size, max_seq_len, model_dim), jnp.float32)
    bound = 1.0 / (model_dim ** 0.5)   # nn.Linear-style uniform init
    weight = jax.random.uniform(
        kw, (label_space_size, model_dim), jnp.float32, -bound, bound)
    bias = jax.random.uniform(
        kb, (label_space_size,), jnp.float32, -bound, bound)

    out = one_word_linear_label_probe(x, weight, bias, zero_features=False)
    out = jax.block_until_ready(out)
    ref = jnp.einsum("bsd,ld->bsl", x, weight,
                     precision=jax.lax.Precision.HIGHEST) + bias
    assert out.shape == (batch_size, max_seq_len, label_space_size)
    assert jnp.allclose(out, ref, atol=1e-5, rtol=1e-5)

    # zero_features path: output is the broadcast bias.
    out0 = one_word_linear_label_probe(x, weight, bias, zero_features=True)
    out0 = jax.block_until_ready(out0)
    assert jnp.allclose(
        out0, jnp.broadcast_to(bias, out0.shape), atol=1e-6, rtol=1e-6)

    # --- larger shapes: multi-step row grid + lane-padded small label space -
    B2, S2, D2, L2 = 4, 300, 256, 16
    x2 = jax.random.normal(kx2, (B2, S2, D2), jnp.float32)
    bound2 = 1.0 / (D2 ** 0.5)
    w2 = jax.random.uniform(kw2, (L2, D2), jnp.float32, -bound2, bound2)
    b2 = jax.random.uniform(kb2, (L2,), jnp.float32, -bound2, bound2)

    out2 = one_word_linear_label_probe(x2, w2, b2)
    out2 = jax.block_until_ready(out2)
    ref2 = jnp.einsum("bsd,ld->bsl", x2, w2,
                      precision=jax.lax.Precision.HIGHEST) + b2
    assert out2.shape == (B2, S2, L2)
    assert jnp.allclose(out2, ref2, atol=1e-4, rtol=1e-4)

    print("KERNEL_OK")
</pallas_src>

<mosaic_0001>
module attributes {stable_mosaic.version = 11 : i64} {
  func.func @_linear_kernel(%arg0: i32, %arg1: i32, %arg2: memref<16x32xf32, #tpu.memory_space<vmem>>, %arg3: memref<32x8xf32, #tpu.memory_space<vmem>>, %arg4: memref<1x8xf32, #tpu.memory_space<vmem>>, %arg5: memref<16x8xf32, #tpu.memory_space<vmem>>) attributes {dimension_semantics = [#tpu.dimension_semantics<parallel>, #tpu.dimension_semantics<arbitrary>], iteration_bounds = array<i64: 1, 1>, scalar_prefetch = 0 : i64, scratch_operands = 0 : i64, tpu.core_type = #tpu.core_type<tc>, window_params = [{transform_indices = @transform_0, window_bounds = array<i64: 16, 32>}, {transform_indices = @transform_1, window_bounds = array<i64: 32, 8>}, {transform_indices = @transform_2, window_bounds = array<i64: 1, 8>}, {transform_indices = @transform_3, window_bounds = array<i64: 16, 8>}]} {
    %c0 = arith.constant 0 : index
    %c0_0 = arith.constant 0 : index
    %0 = vector.load %arg2[%c0, %c0_0] : memref<16x32xf32, #tpu.memory_space<vmem>>, vector<16x32xf32>
    %c0_1 = arith.constant 0 : index
    %c0_2 = arith.constant 0 : index
    %1 = vector.load %arg3[%c0_1, %c0_2] : memref<32x8xf32, #tpu.memory_space<vmem>>, vector<32x8xf32>
    %cst = arith.constant dense<0.000000e+00> : vector<16x8xf32>
    %2 = tpu.matmul %0, %1, %cst {dimension_numbers = #tpu.dot_dimension_numbers<[1], [0], [0], [1], [0, 0, 1, 1], [], []>} : vector<16x32xf32>, vector<32x8xf32>, vector<16x8xf32> -> vector<16x8xf32>
    %c0_3 = arith.constant 0 : index
    %c0_4 = arith.constant 0 : index
    %3 = vector.load %arg4[%c0_3, %c0_4] : memref<1x8xf32, #tpu.memory_space<vmem>>, vector<1x8xf32>
    %4 = vector.broadcast %3 : vector<1x8xf32> to vector<16x8xf32>
    %5 = arith.addf %2, %4 : vector<16x8xf32>
    %c0_5 = arith.constant 0 : index
    %c0_6 = arith.constant 0 : index
    %6 = vector.load %arg5[%c0_5, %c0_6] : memref<16x8xf32, #tpu.memory_space<vmem>>, vector<16x8xf32>
    tpu.vector_store %arg5[%c0_5, %c0_6], %5 {strides = array<i32>} : memref<16x8xf32, #tpu.memory_space<vmem>>, vector<16x8xf32>,
    return
  }
  func.func @transform_0(%arg0: i32, %arg1: i32) -> (i32, i32) {
    %c0_i32 = arith.constant 0 : i32
    %c0_i32_0 = arith.constant 0 : i32
    return %arg0, %c0_i32 : i32, i32
  }
  func.func @transform_1(%arg0: i32, %arg1: i32) -> (i32, i32) {
    %c0_i32 = arith.constant 0 : i32
    %c0_i32_0 = arith.constant 0 : i32
    return %c0_i32, %arg1 : i32, i32
  }
  func.func @transform_2(%arg0: i32, %arg1: i32) -> (i32, i32) {
    %c0_i32 = arith.constant 0 : i32
    %c0_i32_0 = arith.constant 0 : i32
    return %c0_i32, %arg1 : i32, i32
  }
  func.func @transform_3(%arg0: i32, %arg1: i32) -> (i32, i32) {
    %c0_i32 = arith.constant 0 : i32
    return %arg0, %arg1 : i32, i32
  }
}

</mosaic_0001>

<llo_original>
// kernel: one_word_linear_label_probe.1
$region0: #{one_word_linear_label_probe.1}
  #allocation0 [shape = 'u32[]', space=smem, size = 0x4, offset = 0x4, fixed_abs, tag = 'smem constant byte address 0x4 - core index']
  #allocation1 [shape = 'u32[144,128]{1,0:T(1,128)}', space=vmem, size = 0x12000, scoped, tag = 'internal scratch']
  %s0 = inlined_call_operand.vmem [shape: f32[16,32], index: 0, kind: input, shape index: {}]
  %s1 = inlined_call_operand.vmem [shape: f32[32,8], index: 1, kind: input, shape index: {}]
  %s2 = inlined_call_operand.vmem [shape: f32[1,8], index: 2, kind: input, shape index: {}]
  %s3 = inlined_call_operand.hbm [shape: f32[16,8], index: 3, kind: output, shape index: {}]
  %s4 = sld [smem:[#allocation0]]
  $region22: #{one_word_linear_label_probe.1} parent=0
    _
  %s6 = ssub.s32 1, %s4
  %s7 = scalar_select 0, %s6, %s4
  $region1: #{one_word_linear_label_probe.1} parent=0
    #allocation2 [shape = 'u8[8192]{0}', space=vmem, size = 0x2000, scoped, tag = 'output window, operand 0, single buffered']
    #allocation3 [shape = 's32[1]{0}', space=sflag, size = 0x4, scoped, tag = 'scoped memory for one_word_linear_label_probe.1']
    %8 = vsyncpa [#allocation3], 0
    // Predicated region
    $region2: #{one_word_linear_label_probe.1} parent=1 // pred_check
      _
    $region3: #{one_word_linear_label_probe.1} parent=1 // pred_check_branch
      %10 = sbr.rel (0) target = $region5
    $region4: #{one_word_linear_label_probe.1} parent=1 // pred_region
      _
    $region5: #{one_word_linear_label_probe.1} parent=1 // pred_fallthru
      _
    // Predicated region
    $region6: #{one_word_linear_label_probe.1} parent=1 // pred_check
      _
    $region7: #{one_word_linear_label_probe.1} parent=1 // pred_check_branch
      %12 = sbr.rel (0) target = $region9
    $region8: #{one_word_linear_label_probe.1} parent=1 // pred_region
      _
    $region9: #{one_word_linear_label_probe.1} parent=1 // pred_fallthru
      _
    // Predicated region
    $region10: #{one_word_linear_label_probe.1} parent=1 // pred_check
      _
    $region11: #{one_word_linear_label_probe.1} parent=1 // pred_check_branch
      %14 = sbr.rel (0) target = $region13
    $region12: #{one_word_linear_label_probe.1} parent=1 // pred_region
      _
    $region13: #{one_word_linear_label_probe.1} parent=1 // pred_fallthru
      _
    %v15 = vld [vmem:[%s0] sm:$0xff]
    %v16 = vld [vmem:[%s0 + $0x8] sm:$0xff]
    %v17 = vld [vmem:[%s1] sm:$0xff]
    %v18 = vld [vmem:[%s1 + $0x8] sm:$0xff]
    %v19 = vld [vmem:[%s1 + $0x10] sm:$0xff]
    %v20 = vld [vmem:[%s1 + $0x18] sm:$0xff]
    %v21 = vld [vmem:[%s2] sm:$0x1]
    %v23 = vlaneseq
    %v24 = vshrl.u32 %v23, 7
    %v25 = vsub.s32 0, %v24
    %v26 = vrot.slane %v21, %v25
    %vm28 = vcmask 261120
    %v30 = vsel %vm28, %v15, 0
    %v33 = vsel %vm28, %v16, 0
    %35 = vmatprep.subr.mxu0 0.0
    %36 = vmatpush1.msra.mxu0 0.0
    %37 = vmatprep.subr.mxu0 0.0
    %38 = vmatpush1.msra.mxu0 0.0
    %39 = vmatprep.subr.mxu0 0.0
    %40 = vmatpush1.msra.mxu0 0.0
    %41 = vmatprep.subr.mxu0 0.0
    %42 = vmatpush1.msra.mxu0 0.0
    %43 = vmatprep.subr.mxu0 0.0
    %44 = vmatpush1.msra.mxu0 0.0
    %45 = vmatprep.subr.mxu0 0.0
    %46 = vmatpush1.msra.mxu0 0.0
    %47 = vmatprep.subr.mxu0 0.0
    %48 = vmatpush1.msra.mxu0 0.0
    %49 = vmatprep.subr.mxu0 0.0
    %50 = vmatpush1.msra.mxu0 0.0
    %51 = vmatprep.subr.mxu0 0.0
    %52 = vmatpush1.msra.mxu0 0.0
    %53 = vmatprep.subr.mxu0 0.0
    %54 = vmatpush1.msra.mxu0 0.0
    %55 = vmatprep.subr.mxu0 0.0
    %56 = vmatpush1.msra.mxu0 0.0
    %57 = vmatprep.subr.mxu0 0.0
    %58 = vmatpush1.msra.mxu0 0.0
    %59 = vmatprep.subr.mxu0 0.0
    %60 = vmatpush1.msra.mxu0 %v20
    %61 = vmatprep.subr.mxu0 0.0
    %62 = vmatpush1.msra.mxu0 %v19
    %63 = vmatprep.subr.mxu0 0.0
    %64 = vmatpush1.msra.mxu0 %v18
    %65 = vmatprep.subr.mxu0 0.0
    %66 = vmatpush1.msra.mxu0 %v17
    %67 = vmatprep.subr.mxu0 0.0
    %68 = vmatpush2.msra.mxu0 0.0
    %69 = vmatprep.subr.mxu0 0.0
    %70 = vmatpush2.msra.mxu0 0.0
    %71 = vmatprep.subr.mxu0 0.0
    %72 = vmatpush2.msra.mxu0 0.0
    %73 = vmatprep.subr.mxu0 0.0
    %74 = vmatpush2.msra.mxu0 0.0
    %75 = vmatprep.subr.mxu0 0.0
    %76 = vmatpush2.msra.mxu0 0.0
    %77 = vmatprep.subr.mxu0 0.0
    %78 = vmatpush2.msra.mxu0 0.0
    %79 = vmatprep.subr.mxu0 0.0
    %80 = vmatpush2.msra.mxu0 0.0
    %81 = vmatprep.subr.mxu0 0.0
    %82 = vmatpush2.msra.mxu0 0.0
    %83 = vmatprep.subr.mxu0 0.0
    %84 = vmatpush2.msra.mxu0 0.0
    %85 = vmatprep.subr.mxu0 0.0
    %86 = vmatpush2.msra.mxu0 0.0
    %87 = vmatprep.subr.mxu0 0.0
    %88 = vmatpush2.msra.mxu0 0.0
    %89 = vmatprep.subr.mxu0 0.0
    %90 = vmatpush2.msra.mxu0 0.0
    %91 = vmatprep.subr.mxu0 0.0
    %92 = vmatpush2.msra.mxu0 0.0
    %93 = vmatprep.subr.mxu0 0.0
    %94 = vmatpush2.msra.mxu0 0.0
    %95 = vmatprep.subr.mxu0 0.0
    %96 = vmatpush2.msra.mxu0 0.0
    %97 = vmatprep.subr.mxu0 0.0
    %98 = vmatpush2.msra.mxu0 0.0
    %99 = vmatprep.mubr.f32.mxu0 0.0
    %100 = vmatmul.mubr.f32.gmra.mxu0 %v30
    %v101 = vpop.f32.mrf.mxu0
    %v102 = vadd.f32 %v26, %v101
    %v103 = vpop.f32.mrf.mxu0
    %104 = vmatprep.mubr.f32.mxu0 0.0
    %105 = vmatmul.mubr.f32.gmra.mxu0 %v33
    %v106 = vpop.f32.mrf.mxu0
    %v107 = vadd.f32 %v26, %v106
    %v108 = vpop.f32.mrf.mxu0
    %109 = vdwg.mxu0
    %vm110 = vcmask 64512
    %111 = vst.msk [vmem:[#allocation2] sm:$0xff] %vm110, %v102
    %112 = vst.msk [vmem:[#allocation2 + $0x8] sm:$0xff] %vm110, %v107
    // Predicated region
    $region14: #{one_word_linear_label_probe.1} parent=1 // pred_check
      _
    $region15: #{one_word_linear_label_probe.1} parent=1 // pred_check_branch
      %114 = sbr.rel (0) target = $region17
    $region16: #{one_word_linear_label_probe.1} parent=1 // pred_region
      %s116 = ssub.s32 256, 256
      %117 = vsyncadd [#allocation3], %s116
      %s118 = sshll.u32 [#allocation2], 4
      %s119 = int_to_ptr.vmem [resolvable:$true] %s118
      %124 = dma.vmem_to_hbm [thread:$0]  %s119, 256, %s3, [#allocation3], 128, 128, 8
    $region17: #{one_word_linear_label_probe.1} parent=1 // pred_fallthru
      _
    // Predicated region
    $region18: #{one_word_linear_label_probe.1} parent=1 // pred_check
      _
    $region19: #{one_word_linear_label_probe.1} parent=1 // pred_check_branch
      %126 = sbr.rel (0) target = $region21
    $region20: #{one_word_linear_label_probe.1} parent=1 // pred_region
      %127 = dma.done [#allocation3], 256
    $region21: #{one_word_linear_label_probe.1} parent=1 // pred_fallthru
      _
    %128 = vsyncpa [#allocation3], 1

</llo_original>
